<compile_context>
chip_gen: v7x
topology: tpu7x:2x2x1
jax: 0.10.0
libtpu: 0.0.40
codegen_flags: <defaults>
</compile_context>

<pallas_src>
import jax
import jax.numpy as jnp
from jax.experimental import pallas as pl
from jax.experimental.pallas import tpu as pltpu

NEGATIVE_SLOPE = -0.20666897
C_OUT = 9


def _conv1x1_leaky_kernel(x_ref, w_ref, b_ref, o_ref):
    # x_ref: (tn, 1, tl) tile of the zero-padded input
    # w_ref, b_ref: (1, C_OUT, 1) f32 in VMEM
    # o_ref: (tn, C_OUT, tl) tile of the final (N, 9, L+2) output
    v = x_ref[...] * w_ref[...] + b_ref[...]          # broadcast -> (tn, 9, tl), VPU
    o_ref[...] = jnp.where(v > 0.0, v, v * NEGATIVE_SLOPE)


def model_forward(x, weight, bias):
    """x: (N, 1, L); weight: (9, 1, 1); bias: (9,). Returns (N, 9, L+2) f32."""
    n, c_in, length = x.shape
    assert c_in == 1
    l_out = length + 2

    # Zero-pad the length axis (padding=1).  Tiny: ~1/9 of the output traffic.
    x_pad = jnp.pad(x.astype(jnp.float32), ((0, 0), (0, 0), (1, 1)))  # (N,1,L+2)
    w3 = weight.reshape(1, C_OUT, 1).astype(jnp.float32)
    b3 = bias.reshape(1, C_OUT, 1).astype(jnp.float32)

    # Tile sizes: tn is a leading dim (no alignment constraint); tl is either
    # the full length (always legal) or a multiple of 128 with a masked tail.
    tn = min(n, 128)
    tl = l_out if l_out <= 1024 else 1024
    # v7x megacore: try to expose >= 2 parallel grid iterations when possible.
    if pl.cdiv(n, tn) * pl.cdiv(l_out, tl) < 2 and tn >= 16:
        tn = pl.cdiv(tn, 2)
    grid = (pl.cdiv(n, tn), pl.cdiv(l_out, tl))

    return pl.pallas_call(
        _conv1x1_leaky_kernel,
        out_shape=jax.ShapeDtypeStruct((n, C_OUT, l_out), jnp.float32),
        grid=grid,
        in_specs=[
            # Input tile; channel dim (size 1) kept so the kernel broadcasts
            # sublane 1 -> 9 directly, no in-kernel reshape.
            pl.BlockSpec((tn, 1, tl), lambda i, j: (i, 0, j)),
            # Per-channel weight / bias vectors (full-dim blocks, reused).
            pl.BlockSpec((1, C_OUT, 1), lambda i, j: (0, 0, 0)),
            pl.BlockSpec((1, C_OUT, 1), lambda i, j: (0, 0, 0)),
        ],
        # Final (N, 9, L+2) layout written directly: channel dim is a full-dim
        # block, length is lane-dense -> wide unmasked vst.
        out_specs=pl.BlockSpec((tn, C_OUT, tl), lambda i, j: (i, 0, j)),
        compiler_params=pltpu.CompilerParams(
            dimension_semantics=("parallel", "parallel"),
            vmem_limit_bytes=40 * 1024 * 1024,
        ),
    )(x_pad, w3, b3)


if __name__ == "__main__":
    key = jax.random.PRNGKey(0)
    k_x, k_w, k_b = jax.random.split(key, 3)

    # Small shapes consistent with the module: batch=2, in_channels=1, length=16
    N, L = 2, 16
    x = jax.random.normal(k_x, (N, 1, L), dtype=jnp.float32)

    # PyTorch Conv1d default init: U(-1/sqrt(fan_in), 1/sqrt(fan_in)), fan_in=1
    bound = 1.0
    weight = jax.random.uniform(k_w, (C_OUT, 1, 1), minval=-bound, maxval=bound,
                                dtype=jnp.float32)
    bias = jax.random.uniform(k_b, (C_OUT,), minval=-bound, maxval=bound,
                              dtype=jnp.float32)

    out = jax.block_until_ready(model_forward(x, weight, bias))

    # Plain-JAX reference (same math as the PyTorch module).
    x_ref = jnp.pad(x[:, 0, :], ((0, 0), (1, 1)))
    v1 = x_ref[:, None, :] * weight.reshape(1, C_OUT, 1) + bias.reshape(1, C_OUT, 1)
    ref = jnp.where(v1 > 0, v1, v1 * NEGATIVE_SLOPE)

    assert out.shape == (N, C_OUT, L + 2)
    assert jnp.allclose(out, ref, atol=1e-6, rtol=1e-6)
    print("KERNEL_OK")
</pallas_src>

<mosaic_0001>
module attributes {stable_mosaic.version = 11 : i64} {
  func.func @_conv1x1_leaky_kernel(%arg0: i32, %arg1: i32, %arg2: memref<2x1x18xf32, #tpu.memory_space<vmem>>, %arg3: memref<1x9x1xf32, #tpu.memory_space<vmem>>, %arg4: memref<1x9x1xf32, #tpu.memory_space<vmem>>, %arg5: memref<2x9x18xf32, #tpu.memory_space<vmem>>) attributes {dimension_semantics = [#tpu.dimension_semantics<parallel>, #tpu.dimension_semantics<parallel>], iteration_bounds = array<i64: 1, 1>, scalar_prefetch = 0 : i64, scratch_operands = 0 : i64, tpu.core_type = #tpu.core_type<tc>, window_params = [{transform_indices = @transform_0, window_bounds = array<i64: 2, 1, 18>}, {pipeline_mode = #tpu.pipeline_mode<synchronous>, transform_indices = @transform_1, window_bounds = array<i64: 1, 9, 1>}, {pipeline_mode = #tpu.pipeline_mode<synchronous>, transform_indices = @transform_2, window_bounds = array<i64: 1, 9, 1>}, {transform_indices = @transform_3, window_bounds = array<i64: 2, 9, 18>}]} {
    %c0 = arith.constant 0 : index
    %c0_0 = arith.constant 0 : index
    %c0_1 = arith.constant 0 : index
    %0 = vector.load %arg2[%c0, %c0_0, %c0_1] : memref<2x1x18xf32, #tpu.memory_space<vmem>>, vector<2x1x18xf32>
    %c0_2 = arith.constant 0 : index
    %c0_3 = arith.constant 0 : index
    %c0_4 = arith.constant 0 : index
    %1 = vector.load %arg3[%c0_2, %c0_3, %c0_4] : memref<1x9x1xf32, #tpu.memory_space<vmem>>, vector<1x9x1xf32>
    %2 = vector.broadcast %0 : vector<2x1x18xf32> to vector<2x9x18xf32>
    %3 = vector.broadcast %1 : vector<1x9x1xf32> to vector<2x9x18xf32>
    %4 = arith.mulf %2, %3 : vector<2x9x18xf32>
    %c0_5 = arith.constant 0 : index
    %c0_6 = arith.constant 0 : index
    %c0_7 = arith.constant 0 : index
    %5 = vector.load %arg4[%c0_5, %c0_6, %c0_7] : memref<1x9x1xf32, #tpu.memory_space<vmem>>, vector<1x9x1xf32>
    %6 = vector.broadcast %5 : vector<1x9x1xf32> to vector<2x9x18xf32>
    %7 = arith.addf %4, %6 : vector<2x9x18xf32>
    %cst = arith.constant 0.000000e+00 : f32
    %8 = vector.broadcast %cst : f32 to vector<2x9x18xf32>
    %9 = arith.cmpf ogt, %7, %8 : vector<2x9x18xf32>
    %cst_8 = arith.constant -0.206668973 : f32
    %10 = vector.broadcast %cst_8 : f32 to vector<2x9x18xf32>
    %11 = arith.mulf %7, %10 : vector<2x9x18xf32>
    %12 = arith.select %9, %7, %11 : vector<2x9x18xi1>, vector<2x9x18xf32>
    %c0_9 = arith.constant 0 : index
    %c0_10 = arith.constant 0 : index
    %c0_11 = arith.constant 0 : index
    %13 = vector.load %arg5[%c0_9, %c0_10, %c0_11] : memref<2x9x18xf32, #tpu.memory_space<vmem>>, vector<2x9x18xf32>
    tpu.vector_store %arg5[%c0_9, %c0_10, %c0_11], %12 {strides = array<i32>} : memref<2x9x18xf32, #tpu.memory_space<vmem>>, vector<2x9x18xf32>,
    return
  }
  func.func @transform_0(%arg0: i32, %arg1: i32) -> (i32, i32, i32) {
    %c0_i32 = arith.constant 0 : i32
    %c0_i32_0 = arith.constant 0 : i32
    return %arg0, %c0_i32, %arg1 : i32, i32, i32
  }
  func.func @transform_1(%arg0: i32, %arg1: i32) -> (i32, i32, i32) {
    %c0_i32 = arith.constant 0 : i32
    %c0_i32_0 = arith.constant 0 : i32
    %c0_i32_1 = arith.constant 0 : i32
    %c0_i32_2 = arith.constant 0 : i32
    return %c0_i32, %c0_i32_0, %c0_i32_1 : i32, i32, i32
  }
  func.func @transform_2(%arg0: i32, %arg1: i32) -> (i32, i32, i32) {
    %c0_i32 = arith.constant 0 : i32
    %c0_i32_0 = arith.constant 0 : i32
    %c0_i32_1 = arith.constant 0 : i32
    %c0_i32_2 = arith.constant 0 : i32
    return %c0_i32, %c0_i32_0, %c0_i32_1 : i32, i32, i32
  }
  func.func @transform_3(%arg0: i32, %arg1: i32) -> (i32, i32, i32) {
    %c0_i32 = arith.constant 0 : i32
    %c0_i32_0 = arith.constant 0 : i32
    return %arg0, %c0_i32, %arg1 : i32, i32, i32
  }
}

</mosaic_0001>

<llo_original>
// kernel: tpu_custom_call.1
$region0: #{tpu_custom_call.1}
  #allocation0 [shape = 'u32[]', space=smem, size = 0x4, offset = 0x4, fixed_abs, tag = 'smem constant byte address 0x4 - core index']
  #allocation1 [shape = 'u32[144,128]{1,0:T(1,128)}', space=vmem, size = 0x12000, scoped, tag = 'internal scratch']
  %s0 = inlined_call_operand.vmem [shape: f32[2,1,18], index: 0, kind: input, shape index: {}]
  %s1 = inlined_call_operand.vmem [shape: f32[1,9,1], index: 1, kind: input, shape index: {}]
  %s2 = inlined_call_operand.vmem [shape: f32[1,9,1], index: 2, kind: input, shape index: {}]
  %s3 = inlined_call_operand.vmem [shape: f32[2,9,18], index: 3, kind: output, shape index: {}]
  %s4 = sld [smem:[#allocation0]]
  $region22: #{tpu_custom_call.1} parent=0
    _
  %s6 = ssub.s32 1, %s4
  %s7 = scalar_select 0, %s6, %s4
  // Predicated region
  $region2: #{tpu_custom_call.1} parent=0 // pred_check
    _
  $region3: #{tpu_custom_call.1} parent=0 // pred_check_branch
    %9 = sbr.rel (0) target = $region5
  $region4: #{tpu_custom_call.1} parent=0 // pred_region
    _
  $region5: #{tpu_custom_call.1} parent=0 // pred_fallthru
    _
  // Predicated region
  $region6: #{tpu_custom_call.1} parent=0 // pred_check
    _
  $region7: #{tpu_custom_call.1} parent=0 // pred_check_branch
    %11 = sbr.rel (0) target = $region9
  $region8: #{tpu_custom_call.1} parent=0 // pred_region
    _
  $region9: #{tpu_custom_call.1} parent=0 // pred_fallthru
    _
  // Predicated region
  $region10: #{tpu_custom_call.1} parent=0 // pred_check
    _
  $region11: #{tpu_custom_call.1} parent=0 // pred_check_branch
    %13 = sbr.rel (0) target = $region13
  $region12: #{tpu_custom_call.1} parent=0 // pred_region
    _
  $region13: #{tpu_custom_call.1} parent=0 // pred_fallthru
    _
  %v14 = vld [vmem:[%s0] sm:$0x1]
  %v15 = vld [vmem:[%s0 + $0x1] sm:$0x1]
  %v16 = vld [vmem:[%s1] sm:$0xff]
  %v17 = vld [vmem:[%s1 + $0x8] sm:$0x1]
  %v20 = vlaneseq
  %v21 = vshrl.u32 %v20, 7
  %v22 = vsub.s32 0, %v21
  %v23 = vrot.slane %v14, %v22
  %v24 = vlaneseq
  %v25 = vshrl.u32 %v24, 7
  %v26 = vsub.s32 0, %v25
  %v27 = vrot.slane %v15, %v26
  %31 = vset.pattern.permute.xlu0 0
  %32 = vperm.xlu0 %31, %v16
  %v33 = vpop.permute.xlu0 %32
  %36 = vset.pattern.permute.xlu0 0
  %37 = vperm.xlu0 %36, %v17
  %v38 = vpop.permute.xlu0 %37
  %v40 = vmul.f32 %v23, %v33
  %v41 = vmul.f32 %v23, %v38
  %v42 = vmul.f32 %v27, %v33
  %v43 = vmul.f32 %v27, %v38
  %v44 = vld [vmem:[%s2] sm:$0xff]
  %v45 = vld [vmem:[%s2 + $0x8] sm:$0x1]
  %47 = vset.pattern.permute.xlu0 0
  %48 = vperm.xlu0 %47, %v44
  %v49 = vpop.permute.xlu0 %48
  %52 = vset.pattern.permute.xlu0 0
  %53 = vperm.xlu0 %52, %v45
  %v54 = vpop.permute.xlu0 %53
  %v56 = vadd.f32 %v40, %v49
  %v57 = vadd.f32 %v41, %v54
  %v58 = vadd.f32 %v42, %v49
  %v59 = vadd.f32 %v43, %v54
  %vm60 = vcmp.gt.f32.partialorder %v56, 0.0
  %vm61 = vcmp.gt.f32.partialorder %v57, 0.0
  %vm62 = vcmp.gt.f32.partialorder %v58, 0.0
  %vm63 = vcmp.gt.f32.partialorder %v59, 0.0
  %v64 = vmul.f32 %v56, -0.20666897
  %v65 = vmul.f32 %v57, -0.20666897
  %v66 = vmul.f32 %v58, -0.20666897
  %v67 = vmul.f32 %v59, -0.20666897
  %v68 = vsel %vm60, %v56, %v64
  %v69 = vsel %vm61, %v57, %v65
  %v70 = vsel %vm62, %v58, %v66
  %v71 = vsel %vm63, %v59, %v67
  %vm72 = vcmask 146432
  %73 = vst.msk [vmem:[%s3] sm:$0xff] %vm72, %v68
  %vm74 = vcmask 139264
  %75 = vst.msk [vmem:[%s3 + $0x8] sm:$0x1] %vm74, %v69
  %76 = vst.msk [vmem:[%s3 + $0x10] sm:$0xff] %vm72, %v70
  %77 = vst.msk [vmem:[%s3 + $0x18] sm:$0x1] %vm74, %v71
  // Predicated region
  $region14: #{tpu_custom_call.1} parent=0 // pred_check
    _
  $region15: #{tpu_custom_call.1} parent=0 // pred_check_branch
    %79 = sbr.rel (0) target = $region17
  $region16: #{tpu_custom_call.1} parent=0 // pred_region
    _
  $region17: #{tpu_custom_call.1} parent=0 // pred_fallthru
    _
  // Predicated region
  $region18: #{tpu_custom_call.1} parent=0 // pred_check
    _
  $region19: #{tpu_custom_call.1} parent=0 // pred_check_branch
    %81 = sbr.rel (0) target = $region21
  $region20: #{tpu_custom_call.1} parent=0 // pred_region
    _
  $region21: #{tpu_custom_call.1} parent=0 // pred_fallthru
    _

</llo_original>
